<compile_context>
chip_gen: v5e
topology: v5e:2x2
jax: 0.10.0
libtpu: 0.0.40
codegen_flags: <defaults>
</compile_context>

<pallas_src>
import functools

import jax
import jax.numpy as jnp
from jax.experimental import pallas as pl
from jax.experimental.pallas import tpu as pltpu


def _round_up(n, m):
    return ((n + m - 1) // m) * m


def mlp_kernel(x_ref, w1_ref, b1_ref, w2_ref, b2_ref, w3_ref, b3_ref, o_ref):
    x = x_ref[...]                                               # [tb, 3]
    h1 = jnp.maximum(
        jnp.dot(x, w1_ref[...], preferred_element_type=jnp.float32)
        + b1_ref[...], 0.0)                                      # [tb, 32]
    h2 = jnp.maximum(
        jnp.dot(h1, w2_ref[...], preferred_element_type=jnp.float32)
        + b2_ref[...], 0.0)                                      # [tb, 16]
    h3 = (jnp.dot(h2, w3_ref[...], preferred_element_type=jnp.float32)
          + b3_ref[...])                                         # [tb, 3]
    o_ref[...] = h3.astype(o_ref.dtype)


@functools.partial(jax.jit, static_argnames=("block_rows",))
def mlp_forward(x, w1, b1, w2, b2, w3, b3, *, block_rows=1024):
    """Forward pass of the 3->32->16->3 MLP.

    Weights are [in, out] (for x @ W); biases are [1, out]."""
    batch, in_dim = x.shape
    out_dim = w3.shape[1]

    x = x.astype(jnp.float32)
    w1 = w1.astype(jnp.float32)
    w2 = w2.astype(jnp.float32)
    w3 = w3.astype(jnp.float32)
    b1 = b1.reshape(1, -1).astype(jnp.float32)
    b2 = b2.reshape(1, -1).astype(jnp.float32)
    b3 = b3.reshape(1, -1).astype(jnp.float32)

    # Batch tiling. For tiny batches use the full extent (block dim == array
    # dim is always legal).  For larger batches pick a sublane-aligned tile
    # that yields at least 2 grid steps so v7x's 2 TensorCores both get work.
    if batch <= 8:
        tb = batch
    else:
        tb = min(block_rows, _round_up(pl.cdiv(batch, 2), 8))
    grid_b = pl.cdiv(batch, tb)

    # Advisory cost: bytes actually DMA'd (no padding anymore) + logical flops.
    param_bytes = 4 * (w1.size + b1.size + w2.size + b2.size + w3.size + b3.size)
    bytes_accessed = 4 * (x.size + batch * out_dim) + param_bytes
    flops = 2 * batch * (3 * 32 + 32 * 16 + 16 * 3)

    out = pl.pallas_call(
        mlp_kernel,
        out_shape=jax.ShapeDtypeStruct((batch, out_dim), jnp.float32),
        grid=(grid_b,),
        in_specs=[
            pl.BlockSpec((tb, in_dim), lambda i: (i, 0)),   # x tile
            pl.BlockSpec(w1.shape, lambda i: (0, 0)),        # params: resident
            pl.BlockSpec(b1.shape, lambda i: (0, 0)),
            pl.BlockSpec(w2.shape, lambda i: (0, 0)),
            pl.BlockSpec(b2.shape, lambda i: (0, 0)),
            pl.BlockSpec(w3.shape, lambda i: (0, 0)),
            pl.BlockSpec(b3.shape, lambda i: (0, 0)),
        ],
        out_specs=pl.BlockSpec((tb, out_dim), lambda i: (i, 0)),
        compiler_params=pltpu.CompilerParams(
            dimension_semantics=("parallel",)),
        cost_estimate=pl.CostEstimate(
            flops=flops, transcendentals=0, bytes_accessed=bytes_accessed),
    )(x, w1, b1, w2, b2, w3, b3)

    return out


def init_linear_params(key, in_features, out_features):
    """Deterministic init mimicking PyTorch nn.Linear default init.

    Weight is returned as [in_features, out_features] for x @ W."""
    kw, kb = jax.random.split(key)
    bound = 1.0 / (in_features ** 0.5)
    w = jax.random.uniform(kw, (in_features, out_features), jnp.float32,
                           minval=-bound, maxval=bound)
    b = jax.random.uniform(kb, (1, out_features), jnp.float32,
                           minval=-bound, maxval=bound)
    return w, b


def _reference(x, w1, b1, w2, b2, w3, b3):
    h = jnp.maximum(x @ w1 + b1, 0.0)
    h = jnp.maximum(h @ w2 + b2, 0.0)
    return h @ w3 + b3


if __name__ == "__main__":
    key = jax.random.PRNGKey(0)
    k_x, k_x2, k1, k2, k3 = jax.random.split(key, 5)

    w1, b1 = init_linear_params(k1, 3, 32)
    w2, b2 = init_linear_params(k2, 32, 16)
    w3, b3 = init_linear_params(k3, 16, 3)

    # Small demo batch (single grid step).
    batch = 8
    x = jax.random.normal(k_x, (batch, 3), jnp.float32)
    out = jax.block_until_ready(mlp_forward(x, w1, b1, w2, b2, w3, b3))
    ref = _reference(x, w1, b1, w2, b2, w3, b3)
    assert out.shape == (batch, 3)
    assert jnp.allclose(out, ref, atol=1e-5, rtol=1e-5), (
        f"max abs err {jnp.max(jnp.abs(out - ref))}")

    # Larger, non-dividing batch: exercises multi-step grid + ragged last tile.
    batch2 = 50
    x2 = jax.random.normal(k_x2, (batch2, 3), jnp.float32)
    out2 = jax.block_until_ready(mlp_forward(x2, w1, b1, w2, b2, w3, b3))
    ref2 = _reference(x2, w1, b1, w2, b2, w3, b3)
    assert out2.shape == (batch2, 3)
    assert jnp.allclose(out2, ref2, atol=1e-5, rtol=1e-5), (
        f"max abs err {jnp.max(jnp.abs(out2 - ref2))}")

    print("KERNEL_OK")
</pallas_src>

<mosaic_0001>
module attributes {stable_mosaic.version = 11 : i64} {
  func.func @mlp_kernel(%arg0: i32, %arg1: memref<8x3xf32, #tpu.memory_space<vmem>>, %arg2: memref<3x32xf32, #tpu.memory_space<vmem>>, %arg3: memref<1x32xf32, #tpu.memory_space<vmem>>, %arg4: memref<32x16xf32, #tpu.memory_space<vmem>>, %arg5: memref<1x16xf32, #tpu.memory_space<vmem>>, %arg6: memref<16x3xf32, #tpu.memory_space<vmem>>, %arg7: memref<1x3xf32, #tpu.memory_space<vmem>>, %arg8: memref<8x3xf32, #tpu.memory_space<vmem>>) attributes {dimension_semantics = [#tpu.dimension_semantics<parallel>], iteration_bounds = array<i64: 1>, scalar_prefetch = 0 : i64, scratch_operands = 0 : i64, tpu.core_type = #tpu.core_type<tc>, window_params = [{transform_indices = @transform_0, window_bounds = array<i64: 8, 3>}, {pipeline_mode = #tpu.pipeline_mode<synchronous>, transform_indices = @transform_1, window_bounds = array<i64: 3, 32>}, {pipeline_mode = #tpu.pipeline_mode<synchronous>, transform_indices = @transform_2, window_bounds = array<i64: 1, 32>}, {pipeline_mode = #tpu.pipeline_mode<synchronous>, transform_indices = @transform_3, window_bounds = array<i64: 32, 16>}, {pipeline_mode = #tpu.pipeline_mode<synchronous>, transform_indices = @transform_4, window_bounds = array<i64: 1, 16>}, {pipeline_mode = #tpu.pipeline_mode<synchronous>, transform_indices = @transform_5, window_bounds = array<i64: 16, 3>}, {pipeline_mode = #tpu.pipeline_mode<synchronous>, transform_indices = @transform_6, window_bounds = array<i64: 1, 3>}, {transform_indices = @transform_7, window_bounds = array<i64: 8, 3>}]} {
    %c0 = arith.constant 0 : index
    %c0_0 = arith.constant 0 : index
    %0 = vector.load %arg1[%c0, %c0_0] : memref<8x3xf32, #tpu.memory_space<vmem>>, vector<8x3xf32>
    %c0_1 = arith.constant 0 : index
    %c0_2 = arith.constant 0 : index
    %1 = vector.load %arg2[%c0_1, %c0_2] : memref<3x32xf32, #tpu.memory_space<vmem>>, vector<3x32xf32>
    %cst = arith.constant dense<0.000000e+00> : vector<8x32xf32>
    %2 = tpu.matmul %0, %1, %cst {dimension_numbers = #tpu.dot_dimension_numbers<[1], [0], [0], [1], [0, 0, 1, 1], [], []>} : vector<8x3xf32>, vector<3x32xf32>, vector<8x32xf32> -> vector<8x32xf32>
    %c0_3 = arith.constant 0 : index
    %c0_4 = arith.constant 0 : index
    %3 = vector.load %arg3[%c0_3, %c0_4] : memref<1x32xf32, #tpu.memory_space<vmem>>, vector<1x32xf32>
    %4 = vector.broadcast %3 : vector<1x32xf32> to vector<8x32xf32>
    %5 = arith.addf %2, %4 : vector<8x32xf32>
    %cst_5 = arith.constant 0.000000e+00 : f32
    %6 = vector.broadcast %cst_5 : f32 to vector<8x32xf32>
    %7 = arith.maximumf %5, %6 : vector<8x32xf32>
    %c0_6 = arith.constant 0 : index
    %c0_7 = arith.constant 0 : index
    %8 = vector.load %arg4[%c0_6, %c0_7] : memref<32x16xf32, #tpu.memory_space<vmem>>, vector<32x16xf32>
    %cst_8 = arith.constant dense<0.000000e+00> : vector<8x16xf32>
    %9 = tpu.matmul %7, %8, %cst_8 {dimension_numbers = #tpu.dot_dimension_numbers<[1], [0], [0], [1], [0, 0, 1, 1], [], []>} : vector<8x32xf32>, vector<32x16xf32>, vector<8x16xf32> -> vector<8x16xf32>
    %c0_9 = arith.constant 0 : index
    %c0_10 = arith.constant 0 : index
    %10 = vector.load %arg5[%c0_9, %c0_10] : memref<1x16xf32, #tpu.memory_space<vmem>>, vector<1x16xf32>
    %11 = vector.broadcast %10 : vector<1x16xf32> to vector<8x16xf32>
    %12 = arith.addf %9, %11 : vector<8x16xf32>
    %cst_11 = arith.constant 0.000000e+00 : f32
    %13 = vector.broadcast %cst_11 : f32 to vector<8x16xf32>
    %14 = arith.maximumf %12, %13 : vector<8x16xf32>
    %c0_12 = arith.constant 0 : index
    %c0_13 = arith.constant 0 : index
    %15 = vector.load %arg6[%c0_12, %c0_13] : memref<16x3xf32, #tpu.memory_space<vmem>>, vector<16x3xf32>
    %cst_14 = arith.constant dense<0.000000e+00> : vector<8x3xf32>
    %16 = tpu.matmul %14, %15, %cst_14 {dimension_numbers = #tpu.dot_dimension_numbers<[1], [0], [0], [1], [0, 0, 1, 1], [], []>} : vector<8x16xf32>, vector<16x3xf32>, vector<8x3xf32> -> vector<8x3xf32>
    %c0_15 = arith.constant 0 : index
    %c0_16 = arith.constant 0 : index
    %17 = vector.load %arg7[%c0_15, %c0_16] : memref<1x3xf32, #tpu.memory_space<vmem>>, vector<1x3xf32>
    %18 = vector.broadcast %17 : vector<1x3xf32> to vector<8x3xf32>
    %19 = arith.addf %16, %18 : vector<8x3xf32>
    %c0_17 = arith.constant 0 : index
    %c0_18 = arith.constant 0 : index
    %20 = vector.load %arg8[%c0_17, %c0_18] : memref<8x3xf32, #tpu.memory_space<vmem>>, vector<8x3xf32>
    tpu.vector_store %arg8[%c0_17, %c0_18], %19 {strides = array<i32>} : memref<8x3xf32, #tpu.memory_space<vmem>>, vector<8x3xf32>,
    return
  }
  func.func @transform_0(%arg0: i32) -> (i32, i32) {
    %c0_i32 = arith.constant 0 : i32
    %c0_i32_0 = arith.constant 0 : i32
    return %arg0, %c0_i32 : i32, i32
  }
  func.func @transform_1(%arg0: i32) -> (i32, i32) {
    %c0_i32 = arith.constant 0 : i32
    %c0_i32_0 = arith.constant 0 : i32
    %c0_i32_1 = arith.constant 0 : i32
    return %c0_i32, %c0_i32_0 : i32, i32
  }
  func.func @transform_2(%arg0: i32) -> (i32, i32) {
    %c0_i32 = arith.constant 0 : i32
    %c0_i32_0 = arith.constant 0 : i32
    %c0_i32_1 = arith.constant 0 : i32
    return %c0_i32, %c0_i32_0 : i32, i32
  }
  func.func @transform_3(%arg0: i32) -> (i32, i32) {
    %c0_i32 = arith.constant 0 : i32
    %c0_i32_0 = arith.constant 0 : i32
    %c0_i32_1 = arith.constant 0 : i32
    return %c0_i32, %c0_i32_0 : i32, i32
  }
  func.func @transform_4(%arg0: i32) -> (i32, i32) {
    %c0_i32 = arith.constant 0 : i32
    %c0_i32_0 = arith.constant 0 : i32
    %c0_i32_1 = arith.constant 0 : i32
    return %c0_i32, %c0_i32_0 : i32, i32
  }
  func.func @transform_5(%arg0: i32) -> (i32, i32) {
    %c0_i32 = arith.constant 0 : i32
    %c0_i32_0 = arith.constant 0 : i32
    %c0_i32_1 = arith.constant 0 : i32
    return %c0_i32, %c0_i32_0 : i32, i32
  }
  func.func @transform_6(%arg0: i32) -> (i32, i32) {
    %c0_i32 = arith.constant 0 : i32
    %c0_i32_0 = arith.constant 0 : i32
    %c0_i32_1 = arith.constant 0 : i32
    return %c0_i32, %c0_i32_0 : i32, i32
  }
  func.func @transform_7(%arg0: i32) -> (i32, i32) {
    %c0_i32 = arith.constant 0 : i32
    %c0_i32_0 = arith.constant 0 : i32
    return %arg0, %c0_i32 : i32, i32
  }
}

</mosaic_0001>

<llo_original>
// kernel: mlp_forward.1
$region0: #{mlp_forward.1}
  #allocation0 [shape = 'u32[]', space=smem, size = 0x4, offset = 0x4, fixed_abs, tag = 'smem constant byte address 0x4 - core index']
  #allocation1 [shape = 'u32[72,128]{1,0:T(1,128)}', space=vmem, size = 0x9000, scoped, tag = 'internal scratch']
  %s0 = inlined_call_operand.vmem [shape: f32[8,3], index: 0, kind: input, shape index: {}]
  %s1 = inlined_call_operand.vmem [shape: f32[3,32], index: 1, kind: input, shape index: {}]
  %s2 = inlined_call_operand.vmem [shape: f32[1,32], index: 2, kind: input, shape index: {}]
  %s3 = inlined_call_operand.vmem [shape: f32[32,16], index: 3, kind: input, shape index: {}]
  %s4 = inlined_call_operand.vmem [shape: f32[1,16], index: 4, kind: input, shape index: {}]
  %s5 = inlined_call_operand.vmem [shape: f32[16,3], index: 5, kind: input, shape index: {}]
  %s6 = inlined_call_operand.vmem [shape: f32[1,3], index: 6, kind: input, shape index: {}]
  %s7 = inlined_call_operand.vmem [shape: f32[8,3], index: 7, kind: output, shape index: {}]
  %s8 = sld [smem:[#allocation0]]
  $region38: #{mlp_forward.1} parent=0
    _
  %s10 = ssub.s32 1, %s8
  %s11 = scalar_select 0, %s10, %s8
  // Predicated region
  $region2: #{mlp_forward.1} parent=0 // pred_check
    _
  $region3: #{mlp_forward.1} parent=0 // pred_check_branch
    %13 = sbr.rel (0) target = $region5
  $region4: #{mlp_forward.1} parent=0 // pred_region
    _
  $region5: #{mlp_forward.1} parent=0 // pred_fallthru
    _
  // Predicated region
  $region6: #{mlp_forward.1} parent=0 // pred_check
    _
  $region7: #{mlp_forward.1} parent=0 // pred_check_branch
    %15 = sbr.rel (0) target = $region9
  $region8: #{mlp_forward.1} parent=0 // pred_region
    _
  $region9: #{mlp_forward.1} parent=0 // pred_fallthru
    _
  // Predicated region
  $region10: #{mlp_forward.1} parent=0 // pred_check
    _
  $region11: #{mlp_forward.1} parent=0 // pred_check_branch
    %17 = sbr.rel (0) target = $region13
  $region12: #{mlp_forward.1} parent=0 // pred_region
    _
  $region13: #{mlp_forward.1} parent=0 // pred_fallthru
    _
  // Predicated region
  $region14: #{mlp_forward.1} parent=0 // pred_check
    _
  $region15: #{mlp_forward.1} parent=0 // pred_check_branch
    %19 = sbr.rel (0) target = $region17
  $region16: #{mlp_forward.1} parent=0 // pred_region
    _
  $region17: #{mlp_forward.1} parent=0 // pred_fallthru
    _
  // Predicated region
  $region18: #{mlp_forward.1} parent=0 // pred_check
    _
  $region19: #{mlp_forward.1} parent=0 // pred_check_branch
    %21 = sbr.rel (0) target = $region21
  $region20: #{mlp_forward.1} parent=0 // pred_region
    _
  $region21: #{mlp_forward.1} parent=0 // pred_fallthru
    _
  // Predicated region
  $region22: #{mlp_forward.1} parent=0 // pred_check
    _
  $region23: #{mlp_forward.1} parent=0 // pred_check_branch
    %23 = sbr.rel (0) target = $region25
  $region24: #{mlp_forward.1} parent=0 // pred_region
    _
  $region25: #{mlp_forward.1} parent=0 // pred_fallthru
    _
  // Predicated region
  $region26: #{mlp_forward.1} parent=0 // pred_check
    _
  $region27: #{mlp_forward.1} parent=0 // pred_check_branch
    %25 = sbr.rel (0) target = $region29
  $region28: #{mlp_forward.1} parent=0 // pred_region
    _
  $region29: #{mlp_forward.1} parent=0 // pred_fallthru
    _
  %v26 = vld [vmem:[%s0] sm:$0xff]
  %v27 = vld [vmem:[%s1] sm:$0x7]
  %v28 = vld [vmem:[%s2] sm:$0x1]
  %v30 = vperm.slane %v28, 0
  %vm32 = vcmask 23552
  %v34 = vsel %vm32, %v26, 0
  %vm36 = vcmask 1042432
  %v38 = vsel %vm36, %v27, 0
  %40 = vmatpush.msra.mxu0 0.0
  %41 = vmatpush.msra.mxu0 0.0
  %42 = vmatpush.msra.mxu0 0.0
  %43 = vmatpush.msra.mxu0 0.0
  %44 = vmatpush.msra.mxu0 0.0
  %45 = vmatpush.msra.mxu0 0.0
  %46 = vmatpush.msra.mxu0 0.0
  %47 = vmatpush.msra.mxu0 0.0
  %48 = vmatpush.msra.mxu0 0.0
  %49 = vmatpush.msra.mxu0 0.0
  %50 = vmatpush.msra.mxu0 0.0
  %51 = vmatpush.msra.mxu0 0.0
  %52 = vmatpush.msra.mxu0 0.0
  %53 = vmatpush.msra.mxu0 0.0
  %54 = vmatpush.msra.mxu0 0.0
  %55 = vmatpush.msra.mxu0 %v38
  %56 = vmatmul.f32.gmra.mxu0 %v34
  %v57 = vpop.f32.mrf.mxu0
  %v58 = vadd.f32 %v30, %v57
  %59 = vdwg.mxu0
  %v60 = vmax.f32 %v58, 0.0
  %v61 = vld [vmem:[%s3] sm:$0xff]
  %v62 = vld [vmem:[%s3 + $0x8] sm:$0xff]
  %v63 = vld [vmem:[%s3 + $0x10] sm:$0xff]
  %v64 = vld [vmem:[%s3 + $0x18] sm:$0xff]
  %v65 = vld [vmem:[%s4] sm:$0x1]
  %v67 = vperm.slane %v65, 0
  %vm69 = vcmask 261120
  %v71 = vsel %vm69, %v60, 0
  %73 = vmatpush.msra.mxu0 0.0
  %74 = vmatpush.msra.mxu0 0.0
  %75 = vmatpush.msra.mxu0 0.0
  %76 = vmatpush.msra.mxu0 0.0
  %77 = vmatpush.msra.mxu0 0.0
  %78 = vmatpush.msra.mxu0 0.0
  %79 = vmatpush.msra.mxu0 0.0
  %80 = vmatpush.msra.mxu0 0.0
  %81 = vmatpush.msra.mxu0 0.0
  %82 = vmatpush.msra.mxu0 0.0
  %83 = vmatpush.msra.mxu0 0.0
  %84 = vmatpush.msra.mxu0 0.0
  %85 = vmatpush.msra.mxu0 %v64
  %86 = vmatpush.msra.mxu0 %v63
  %87 = vmatpush.msra.mxu0 %v62
  %88 = vmatpush.msra.mxu0 %v61
  %89 = vmatmul.f32.gmra.mxu0 %v71
  %v90 = vpop.f32.mrf.mxu0
  %v91 = vadd.f32 %v67, %v90
  %92 = vdwg.mxu0
  %v93 = vmax.f32 %v91, 0.0
  %v94 = vld [vmem:[%s5] sm:$0xff]
  %v95 = vld [vmem:[%s5 + $0x8] sm:$0xff]
  %v96 = vld [vmem:[%s6] sm:$0x1]
  %v98 = vperm.slane %v96, 0
  %vm100 = vcmask 130048
  %v102 = vsel %vm100, %v93, 0
  %104 = vmatpush.msra.mxu0 0.0
  %105 = vmatpush.msra.mxu0 0.0
  %106 = vmatpush.msra.mxu0 0.0
  %107 = vmatpush.msra.mxu0 0.0
  %108 = vmatpush.msra.mxu0 0.0
  %109 = vmatpush.msra.mxu0 0.0
  %110 = vmatpush.msra.mxu0 0.0
  %111 = vmatpush.msra.mxu0 0.0
  %112 = vmatpush.msra.mxu0 0.0
  %113 = vmatpush.msra.mxu0 0.0
  %114 = vmatpush.msra.mxu0 0.0
  %115 = vmatpush.msra.mxu0 0.0
  %116 = vmatpush.msra.mxu0 0.0
  %117 = vmatpush.msra.mxu0 0.0
  %118 = vmatpush.msra.mxu0 %v95
  %119 = vmatpush.msra.mxu0 %v94
  %120 = vmatmul.f32.gmra.mxu0 %v102
  %v121 = vpop.f32.mrf.mxu0
  %v122 = vadd.f32 %v98, %v121
  %123 = vdwg.mxu0
  %124 = vst.msk [vmem:[%s7] sm:$0xff] %vm32, %v122
  // Predicated region
  $region30: #{mlp_forward.1} parent=0 // pred_check
    _
  $region31: #{mlp_forward.1} parent=0 // pred_check_branch
    %126 = sbr.rel (0) target = $region33
  $region32: #{mlp_forward.1} parent=0 // pred_region
    _
  $region33: #{mlp_forward.1} parent=0 // pred_fallthru
    _
  // Predicated region
  $region34: #{mlp_forward.1} parent=0 // pred_check
    _
  $region35: #{mlp_forward.1} parent=0 // pred_check_branch
    %128 = sbr.rel (0) target = $region37
  $region36: #{mlp_forward.1} parent=0 // pred_region
    _
  $region37: #{mlp_forward.1} parent=0 // pred_fallthru
    _

</llo_original>
